<compile_context>
chip_gen: v5e
topology: v5e:2x2
jax: 0.10.0
libtpu: 0.0.40
codegen_flags: <defaults>
</compile_context>

<pallas_src>
import jax
import jax.numpy as jnp
from jax import lax
from jax.experimental import pallas as pl
from jax.experimental.pallas import tpu as pltpu

EPS = 1e-5


def _round_up(x, m):
    return ((x + m - 1) // m) * m


# ----------------------------------------------------------------------------
# Kernel
# ----------------------------------------------------------------------------
def skipblock_kernel(x_ref, vecf_ref, w1_ref, t2_ref, w2_ref, o_ref):
    # BN1 (eval, pre-folded affine) + ReLU; dropout1 = identity (eval).
    s1 = vecf_ref[0:1, :]                                   # (1, f) f32
    t1 = vecf_ref[1:2, :]                                   # (1, f) f32
    h = jnp.maximum(x_ref[...].astype(jnp.float32) * s1 + t1, 0.0)

    # Linear1 (weight-normed, BN2 scale folded into columns) + folded shift.
    h = jnp.dot(h.astype(w1_ref.dtype), w1_ref[...],
                preferred_element_type=jnp.float32) + t2_ref[...]

    # BN2 already applied via folding; ReLU; dropout2 = identity (eval).
    h = jnp.maximum(h, 0.0)

    # Linear2 + bias.
    h = jnp.dot(h.astype(w2_ref.dtype), w2_ref[...],
                preferred_element_type=jnp.float32) + vecf_ref[2:3, :]

    # Residual add: re-read x from the resident input block (do not keep it
    # live across both matmuls).
    o_ref[...] = (h + x_ref[...].astype(jnp.float32)).astype(o_ref.dtype)


# ----------------------------------------------------------------------------
# Param prep (one-time, outside the kernel)
# ----------------------------------------------------------------------------
def prepare_operands(params, *, weight_dtype=jnp.bfloat16):
    """Fold BN affine terms into per-feature vectors / Linear1 weight columns."""
    f_in, mid = params["w1"].shape

    # BN1: (x - m1) * rsqrt(v1+eps) * g1 + b1  ==  x*scale1 + shift1
    scale1 = params["g1"] * lax.rsqrt(params["v1"] + EPS)            # (1, f_in)
    shift1 = params["b1"] - params["m1"] * scale1                    # (1, f_in)

    # BN2 folded into Linear1:  (h@W1 + bias1 - m2)*scale2 + b2
    scale2 = params["g2"] * lax.rsqrt(params["v2"] + EPS)            # (1, mid)
    shift2 = (params["bias1"] - params["m2"]) * scale2 + params["b2"]

    # One (3, f_in) slab: rows = [scale1, shift1, bias2]  (fewer DMA streams).
    vec_f = jnp.concatenate([scale1, shift1, params["bias2"]],
                            axis=0).astype(jnp.float32)

    return {
        "f_in": f_in,
        "mid": mid,
        "vec_f": vec_f,                                              # (3, f_in)
        "w1": (params["w1"] * scale2).astype(weight_dtype),          # (f_in, mid)
        "shift2": shift2.astype(jnp.float32),                        # (1, mid)
        "w2": params["w2"].astype(weight_dtype),                     # (mid, f_in)
    }


# ----------------------------------------------------------------------------
# Wrapper helpers
# ----------------------------------------------------------------------------
def _vmem_budget_bytes():
    cap = 64 * 1024 * 1024          # conservative default (v7x per-TC VMEM)
    try:
        cap = int(pltpu.get_tpu_info().vmem_capacity_bytes)
    except Exception:
        pass
    return int(cap * 0.75)          # ~25% headroom for Mosaic internal scratch


def _device_kind():
    try:
        return jax.devices()[0].device_kind.lower()
    except Exception:
        return ""


def _padded_bytes(rows, cols, itemsize):
    # Rough VMEM footprint of a (rows, cols) buffer incl. (8,128) tile padding.
    row_tile = 8 * max(1, 4 // itemsize)
    return _round_up(max(rows, 1), row_tile) * _round_up(max(cols, 1), 128) * itemsize


def _const_spec(shape, buffered):
    imap = lambda i: (0, 0)
    if buffered and hasattr(pl, "Buffered"):
        try:
            # These blocks never change across grid steps -> single-buffer them.
            return pl.BlockSpec(shape, imap, pipeline_mode=pl.Buffered(1))
        except Exception:
            pass
    return pl.BlockSpec(shape, imap)


# ----------------------------------------------------------------------------
# Wrapper
# ----------------------------------------------------------------------------
def skipblock_forward(x, ops, *, out_dtype=None, max_tile_n=1024):
    N, f_in = x.shape
    assert f_in == ops["f_in"]
    mid = ops["mid"]
    out_dtype = x.dtype if out_dtype is None else out_dtype

    x_item = jnp.dtype(x.dtype).itemsize
    o_item = jnp.dtype(out_dtype).itemsize
    w_item = jnp.dtype(ops["w1"].dtype).itemsize

    const_bytes = (_padded_bytes(f_in, mid, w_item)
                   + _padded_bytes(mid, f_in, w_item)
                   + _padded_bytes(3, f_in, 4)
                   + _padded_bytes(1, mid, 4))

    budget = _vmem_budget_bytes()
    kind = _device_kind()
    use_core_parallel = ("v7" in kind) and hasattr(pltpu, "CORE_PARALLEL")

    # Batch-tile sublane multiple (8 rows for 4-byte dtypes, 16 for 2-byte).
    sublane = 8 * max(1, 4 // min(x_item, o_item))

    def vmem_estimate(t, const_factor):
        act = 2 * (_padded_bytes(t, f_in, x_item) + _padded_bytes(t, f_in, o_item))
        inter = 4 * _padded_bytes(t, max(f_in, mid), 4)   # h f32 + bf16 copies
        return act + inter + const_factor * const_bytes + (4 << 20)

    tile_n = min(max_tile_n, N)
    if use_core_parallel and N > sublane:
        # Guarantee >= 2 grid steps so both v7x TensorCores get work.
        tile_n = min(tile_n, _round_up(pl.cdiv(N, 2), sublane))
    if tile_n < N:
        tile_n = max(sublane, (tile_n // sublane) * sublane)
    while tile_n > sublane and vmem_estimate(tile_n, 2) > budget:
        tile_n = max(sublane, (tile_n // 2 // sublane) * sublane)
    tile_n = min(tile_n, N)

    grid = (pl.cdiv(N, tile_n),)
    vmem_limit = int(min(max(vmem_estimate(tile_n, 2), 32 << 20), budget))

    cost = pl.CostEstimate(
        flops=4 * N * f_in * mid,
        transcendentals=0,
        bytes_accessed=(N * f_in * (x_item + o_item)
                        + 2 * f_in * mid * w_item
                        + (3 * f_in + mid) * 4),
    )
    out_shape = jax.ShapeDtypeStruct((N, f_in), out_dtype)
    best_sem = (pltpu.CORE_PARALLEL,) if use_core_parallel else ("parallel",)

    def run(buffered, semantics):
        in_specs = [
            pl.BlockSpec((tile_n, f_in), lambda i: (i, 0)),   # x tile (streamed)
            _const_spec((3, f_in), buffered),                 # scale1/shift1/bias2
            _const_spec((f_in, mid), buffered),               # W1' (resident)
            _const_spec((1, mid), buffered),                  # shift2
            _const_spec((mid, f_in), buffered),               # W2  (resident)
        ]
        return pl.pallas_call(
            skipblock_kernel,
            out_shape=out_shape,
            grid=grid,
            in_specs=in_specs,
            out_specs=pl.BlockSpec((tile_n, f_in), lambda i: (i, 0)),
            compiler_params=pltpu.CompilerParams(
                dimension_semantics=semantics,
                vmem_limit_bytes=vmem_limit,
            ),
            cost_estimate=cost,
        )(x, ops["vec_f"], ops["w1"], ops["shift2"], ops["w2"])

    # Fallback ladder: aggressive -> conservative configs.
    attempts = [(True, best_sem)]
    if best_sem != ("parallel",):
        attempts.append((True, ("parallel",)))
    attempts.append((False, ("parallel",)))
    attempts.append((False, ("arbitrary",)))

    err = None
    for buffered, semantics in attempts:
        try:
            return run(buffered, semantics)
        except Exception as e:      # retry with a more conservative config
            err = e
    raise err


# ----------------------------------------------------------------------------
# Synthetic params + references
# ----------------------------------------------------------------------------
def make_params(key, in_features, hidden_features, bottleneck_factor=0.5):
    """Deterministic synthetic parameters matching SKIPblock.__init__ shapes."""
    mid = int(hidden_features * bottleneck_factor)
    ks = jax.random.split(key, 10)

    g1 = jax.random.normal(ks[0], (1, in_features), jnp.float32) * 0.1 + 1.0
    b1 = jax.random.normal(ks[1], (1, in_features), jnp.float32) * 0.1
    m1 = jax.random.normal(ks[2], (1, in_features), jnp.float32) * 0.1
    v1 = jnp.abs(jax.random.normal(ks[3], (1, in_features), jnp.float32)) * 0.1 + 1.0

    # weight_norm(Linear(in_features, mid)), dim=0 -> per-output-row norm.
    v_w1 = jax.random.normal(ks[4], (mid, in_features), jnp.float32) * 0.1
    g_w1 = jnp.abs(jax.random.normal(ks[5], (mid,), jnp.float32)) + 0.5
    w1_eff = (g_w1[:, None] * v_w1 /
              jnp.linalg.norm(v_w1, axis=1, keepdims=True))          # (mid, in)
    bias1 = jax.random.normal(ks[6], (1, mid), jnp.float32) * 0.1

    g2 = jax.random.normal(ks[7], (1, mid), jnp.float32) * 0.1 + 1.0
    b2 = jax.random.normal(ks[8], (1, mid), jnp.float32) * 0.1
    m2 = jnp.zeros((1, mid), jnp.float32)
    v2 = jnp.ones((1, mid), jnp.float32)

    ks2 = jax.random.split(ks[9], 3)
    v_w2 = jax.random.normal(ks2[0], (in_features, mid), jnp.float32) * 0.1
    g_w2 = jnp.abs(jax.random.normal(ks2[1], (in_features,), jnp.float32)) + 0.5
    w2_eff = (g_w2[:, None] * v_w2 /
              jnp.linalg.norm(v_w2, axis=1, keepdims=True))          # (in, mid)
    bias2 = jax.random.normal(ks2[2], (1, in_features), jnp.float32) * 0.1

    return {
        "g1": g1, "b1": b1, "m1": m1, "v1": v1,
        "w1": w1_eff.T,            # (in_features, mid) — pre-transposed, h @ W
        "bias1": bias1,
        "g2": g2, "b2": b2, "m2": m2, "v2": v2,
        "w2": w2_eff.T,            # (mid, in_features)
        "bias2": bias2,
    }


def reference_forward(x, p):
    """Pure-JAX f32 reference of the module's eval-mode forward."""
    h = (x - p["m1"]) * lax.rsqrt(p["v1"] + EPS) * p["g1"] + p["b1"]
    h = jnp.maximum(h, 0.0)
    h = h @ p["w1"] + p["bias1"]
    h = (h - p["m2"]) * lax.rsqrt(p["v2"] + EPS) * p["g2"] + p["b2"]
    h = jnp.maximum(h, 0.0)
    h = h @ p["w2"] + p["bias2"]
    return h + x


def reference_forward_prepared(x, ops):
    """Pure-JAX mirror of the exact kernel math (folded + bf16 matmul inputs)."""
    xf = x.astype(jnp.float32)
    s1 = ops["vec_f"][0:1]
    t1 = ops["vec_f"][1:2]
    bias2 = ops["vec_f"][2:3]
    h = jnp.maximum(xf * s1 + t1, 0.0)
    h = jnp.dot(h.astype(ops["w1"].dtype), ops["w1"],
                preferred_element_type=jnp.float32) + ops["shift2"]
    h = jnp.maximum(h, 0.0)
    h = jnp.dot(h.astype(ops["w2"].dtype), ops["w2"],
                preferred_element_type=jnp.float32) + bias2
    return (h + xf).astype(x.dtype)


# ----------------------------------------------------------------------------
# Demo / check
# ----------------------------------------------------------------------------
if __name__ == "__main__":
    key = jax.random.PRNGKey(0)
    k_x, k_p = jax.random.split(key)

    batch = 8
    in_features = 32
    hidden_features = 32        # bottleneck_factor=0.5 -> mid = 16

    x = jax.random.normal(k_x, (batch, in_features), jnp.float32)
    params = make_params(k_p, in_features, hidden_features, bottleneck_factor=0.5)
    ops = prepare_operands(params)

    out = jax.block_until_ready(skipblock_forward(x, ops))
    assert out.shape == (batch, in_features)
    assert out.dtype == x.dtype

    # Loose check vs the f32 module semantics (bf16 matmul tolerance).
    ref_f32 = reference_forward(x, params)
    assert jnp.allclose(out, ref_f32, atol=5e-2, rtol=5e-2), \
        "mismatch vs f32 module reference"

    # Tight check vs a pure-JAX mirror of the exact kernel math.
    ref_prep = reference_forward_prepared(x, ops)
    assert jnp.allclose(out, ref_prep, atol=2e-3, rtol=2e-3), \
        "mismatch vs prepared (bf16/folded) reference"

    # Exercise the bandwidth-optimized activation path: bf16 in / bf16 out.
    x_bf16 = x.astype(jnp.bfloat16)
    out_bf16 = jax.block_until_ready(
        skipblock_forward(x_bf16, ops, out_dtype=jnp.bfloat16))
    assert out_bf16.shape == (batch, in_features)
    assert jnp.allclose(out_bf16.astype(jnp.float32), ref_f32,
                        atol=1.5e-1, rtol=1e-1), \
        "mismatch on bf16 activation path"

    print("KERNEL_OK")
</pallas_src>

<mosaic_0001>
module attributes {stable_mosaic.version = 11 : i64} {
  func.func @skipblock_kernel(%arg0: i32, %arg1: memref<8x32xf32, #tpu.memory_space<vmem>>, %arg2: memref<3x32xf32, #tpu.memory_space<vmem>>, %arg3: memref<32x16xbf16, #tpu.memory_space<vmem>>, %arg4: memref<1x16xf32, #tpu.memory_space<vmem>>, %arg5: memref<16x32xbf16, #tpu.memory_space<vmem>>, %arg6: memref<8x32xf32, #tpu.memory_space<vmem>>) attributes {dimension_semantics = [#tpu.dimension_semantics<parallel>], iteration_bounds = array<i64: 1>, scalar_prefetch = 0 : i64, scratch_operands = 0 : i64, tpu.core_type = #tpu.core_type<tc>, window_params = [{transform_indices = @transform_0, window_bounds = array<i64: 8, 32>}, {pipeline_mode = #tpu.pipeline_mode<synchronous>, transform_indices = @transform_1, window_bounds = array<i64: 3, 32>}, {pipeline_mode = #tpu.pipeline_mode<synchronous>, transform_indices = @transform_2, window_bounds = array<i64: 32, 16>}, {pipeline_mode = #tpu.pipeline_mode<synchronous>, transform_indices = @transform_3, window_bounds = array<i64: 1, 16>}, {pipeline_mode = #tpu.pipeline_mode<synchronous>, transform_indices = @transform_4, window_bounds = array<i64: 16, 32>}, {transform_indices = @transform_5, window_bounds = array<i64: 8, 32>}]} {
    %c0 = arith.constant 0 : index
    %c0_0 = arith.constant 0 : index
    %0 = vector.load %arg2[%c0, %c0_0] : memref<3x32xf32, #tpu.memory_space<vmem>>, vector<1x32xf32>
    %c1 = arith.constant 1 : index
    %c0_1 = arith.constant 0 : index
    %1 = vector.load %arg2[%c1, %c0_1] : memref<3x32xf32, #tpu.memory_space<vmem>>, vector<1x32xf32>
    %c0_2 = arith.constant 0 : index
    %c0_3 = arith.constant 0 : index
    %2 = vector.load %arg1[%c0_2, %c0_3] : memref<8x32xf32, #tpu.memory_space<vmem>>, vector<8x32xf32>
    %3 = vector.broadcast %0 : vector<1x32xf32> to vector<8x32xf32>
    %4 = arith.mulf %2, %3 : vector<8x32xf32>
    %5 = vector.broadcast %1 : vector<1x32xf32> to vector<8x32xf32>
    %6 = arith.addf %4, %5 : vector<8x32xf32>
    %cst = arith.constant 0.000000e+00 : f32
    %7 = vector.broadcast %cst : f32 to vector<8x32xf32>
    %8 = arith.maximumf %6, %7 : vector<8x32xf32>
    %9 = arith.truncf %8 : vector<8x32xf32> to vector<8x32xbf16>
    %c0_4 = arith.constant 0 : index
    %c0_5 = arith.constant 0 : index
    %10 = vector.load %arg3[%c0_4, %c0_5] : memref<32x16xbf16, #tpu.memory_space<vmem>>, vector<32x16xbf16>
    %cst_6 = arith.constant dense<0.000000e+00> : vector<8x16xf32>
    %11 = tpu.matmul %9, %10, %cst_6 {dimension_numbers = #tpu.dot_dimension_numbers<[1], [0], [0], [1], [0, 0, 1, 1], [], []>} : vector<8x32xbf16>, vector<32x16xbf16>, vector<8x16xf32> -> vector<8x16xf32>
    %c0_7 = arith.constant 0 : index
    %c0_8 = arith.constant 0 : index
    %12 = vector.load %arg4[%c0_7, %c0_8] : memref<1x16xf32, #tpu.memory_space<vmem>>, vector<1x16xf32>
    %13 = vector.broadcast %12 : vector<1x16xf32> to vector<8x16xf32>
    %14 = arith.addf %11, %13 : vector<8x16xf32>
    %cst_9 = arith.constant 0.000000e+00 : f32
    %15 = vector.broadcast %cst_9 : f32 to vector<8x16xf32>
    %16 = arith.maximumf %14, %15 : vector<8x16xf32>
    %17 = arith.truncf %16 : vector<8x16xf32> to vector<8x16xbf16>
    %c0_10 = arith.constant 0 : index
    %c0_11 = arith.constant 0 : index
    %18 = vector.load %arg5[%c0_10, %c0_11] : memref<16x32xbf16, #tpu.memory_space<vmem>>, vector<16x32xbf16>
    %cst_12 = arith.constant dense<0.000000e+00> : vector<8x32xf32>
    %19 = tpu.matmul %17, %18, %cst_12 {dimension_numbers = #tpu.dot_dimension_numbers<[1], [0], [0], [1], [0, 0, 1, 1], [], []>} : vector<8x16xbf16>, vector<16x32xbf16>, vector<8x32xf32> -> vector<8x32xf32>
    %c2 = arith.constant 2 : index
    %c0_13 = arith.constant 0 : index
    %20 = vector.load %arg2[%c2, %c0_13] : memref<3x32xf32, #tpu.memory_space<vmem>>, vector<1x32xf32>
    %21 = vector.broadcast %20 : vector<1x32xf32> to vector<8x32xf32>
    %22 = arith.addf %19, %21 : vector<8x32xf32>
    %c0_14 = arith.constant 0 : index
    %c0_15 = arith.constant 0 : index
    %23 = vector.load %arg1[%c0_14, %c0_15] : memref<8x32xf32, #tpu.memory_space<vmem>>, vector<8x32xf32>
    %24 = arith.addf %22, %23 : vector<8x32xf32>
    %c0_16 = arith.constant 0 : index
    %c0_17 = arith.constant 0 : index
    %25 = vector.load %arg6[%c0_16, %c0_17] : memref<8x32xf32, #tpu.memory_space<vmem>>, vector<8x32xf32>
    tpu.vector_store %arg6[%c0_16, %c0_17], %24 {strides = array<i32>} : memref<8x32xf32, #tpu.memory_space<vmem>>, vector<8x32xf32>,
    return
  }
  func.func @transform_0(%arg0: i32) -> (i32, i32) {
    %c0_i32 = arith.constant 0 : i32
    %c0_i32_0 = arith.constant 0 : i32
    return %arg0, %c0_i32 : i32, i32
  }
  func.func @transform_1(%arg0: i32) -> (i32, i32) {
    %c0_i32 = arith.constant 0 : i32
    %c0_i32_0 = arith.constant 0 : i32
    %c0_i32_1 = arith.constant 0 : i32
    return %c0_i32, %c0_i32_0 : i32, i32
  }
  func.func @transform_2(%arg0: i32) -> (i32, i32) {
    %c0_i32 = arith.constant 0 : i32
    %c0_i32_0 = arith.constant 0 : i32
    %c0_i32_1 = arith.constant 0 : i32
    return %c0_i32, %c0_i32_0 : i32, i32
  }
  func.func @transform_3(%arg0: i32) -> (i32, i32) {
    %c0_i32 = arith.constant 0 : i32
    %c0_i32_0 = arith.constant 0 : i32
    %c0_i32_1 = arith.constant 0 : i32
    return %c0_i32, %c0_i32_0 : i32, i32
  }
  func.func @transform_4(%arg0: i32) -> (i32, i32) {
    %c0_i32 = arith.constant 0 : i32
    %c0_i32_0 = arith.constant 0 : i32
    %c0_i32_1 = arith.constant 0 : i32
    return %c0_i32, %c0_i32_0 : i32, i32
  }
  func.func @transform_5(%arg0: i32) -> (i32, i32) {
    %c0_i32 = arith.constant 0 : i32
    %c0_i32_0 = arith.constant 0 : i32
    return %arg0, %c0_i32 : i32, i32
  }
}

module attributes {stable_mosaic.version = 11 : i64} {
  func.func @skipblock_kernel(%arg0: i32, %arg1: memref<8x32xf32, #tpu.memory_space<vmem>>, %arg2: memref<3x32xf32, #tpu.memory_space<vmem>>, %arg3: memref<32x16xbf16, #tpu.memory_space<vmem>>, %arg4: memref<1x16xf32, #tpu.memory_space<vmem>>, %arg5: memref<16x32xbf16, #tpu.memory_space<vmem>>, %arg6: memref<8x32xf32, #tpu.memory_space<vmem>>) attributes {dimension_semantics = [#tpu.dimension_semantics<parallel>], iteration_bounds = array<i64: 1>, scalar_prefetch = 0 : i64, scratch_operands = 0 : i64, tpu.core_type = #tpu.core_type<tc>, window_params = [{transform_indices = @transform_0, window_bounds = array<i64: 8, 32>}, {pipeline_mode = #tpu.pipeline_mode<synchronous>, transform_indices = @transform_1, window_bounds = array<i64: 3, 32>}, {pipeline_mode = #tpu.pipeline_mode<synchronous>, transform_indices = @transform_2, window_bounds = array<i64: 32, 16>}, {pipeline_mode = #tpu.pipeline_mode<synchronous>, transform_indices = @transform_3, window_bounds = array<i64: 1, 16>}, {pipeline_mode = #tpu.pipeline_mode<synchronous>, transform_indices = @transform_4, window_bounds = array<i64: 16, 32>}, {transform_indices = @transform_5, window_bounds = array<i64: 8, 32>}]} {
    %c0 = arith.constant 0 : index
    %c0_0 = arith.constant 0 : index
    %0 = vector.load %arg2[%c0, %c0_0] : memref<3x32xf32, #tpu.memory_space<vmem>>, vector<1x32xf32>
    %c1 = arith.constant 1 : index
    %c0_1 = arith.constant 0 : index
    %1 = vector.load %arg2[%c1, %c0_1] : memref<3x32xf32, #tpu.memory_space<vmem>>, vector<1x32xf32>
    %c0_2 = arith.constant 0 : index
    %c0_3 = arith.constant 0 : index
    %2 = vector.load %arg1[%c0_2, %c0_3] : memref<8x32xf32, #tpu.memory_space<vmem>>, vector<8x32xf32>
    %3 = vector.broadcast %0 : vector<1x32xf32> to vector<8x32xf32>
    %4 = arith.mulf %2, %3 : vector<8x32xf32>
    %5 = vector.broadcast %1 : vector<1x32xf32> to vector<8x32xf32>
    %6 = arith.addf %4, %5 : vector<8x32xf32>
    %cst = arith.constant 0.000000e+00 : f32
    %7 = vector.broadcast %cst : f32 to vector<8x32xf32>
    %8 = arith.maximumf %6, %7 : vector<8x32xf32>
    %9 = arith.truncf %8 : vector<8x32xf32> to vector<8x32xbf16>
    %c0_4 = arith.constant 0 : index
    %c0_5 = arith.constant 0 : index
    %10 = vector.load %arg3[%c0_4, %c0_5] : memref<32x16xbf16, #tpu.memory_space<vmem>>, vector<32x16xbf16>
    %cst_6 = arith.constant dense<0.000000e+00> : vector<8x16xf32>
    %11 = tpu.matmul %9, %10, %cst_6 {dimension_numbers = #tpu.dot_dimension_numbers<[1], [0], [0], [1], [0, 0, 1, 1], [], []>} : vector<8x32xbf16>, vector<32x16xbf16>, vector<8x16xf32> -> vector<8x16xf32>
    %c0_7 = arith.constant 0 : index
    %c0_8 = arith.constant 0 : index
    %12 = vector.load %arg4[%c0_7, %c0_8] : memref<1x16xf32, #tpu.memory_space<vmem>>, vector<1x16xf32>
    %13 = vector.broadcast %12 : vector<1x16xf32> to vector<8x16xf32>
    %14 = arith.addf %11, %13 : vector<8x16xf32>
    %cst_9 = arith.constant 0.000000e+00 : f32
    %15 = vector.broadcast %cst_9 : f32 to vector<8x16xf32>
    %16 = arith.maximumf %14, %15 : vector<8x16xf32>
    %17 = arith.truncf %16 : vector<8x16xf32> to vector<8x16xbf16>
    %c0_10 = arith.constant 0 : index
    %c0_11 = arith.constant 0 : index
    %18 = vector.load %arg5[%c0_10, %c0_11] : memref<16x32xbf16, #tpu.memory_space<vmem>>, vector<16x32xbf16>
    %cst_12 = arith.constant dense<0.000000e+00> : vector<8x32xf32>
    %19 = tpu.matmul %17, %18, %cst_12 {dimension_numbers = #tpu.dot_dimension_numbers<[1], [0], [0], [1], [0, 0, 1, 1], [], []>} : vector<8x16xbf16>, vector<16x32xbf16>, vector<8x32xf32> -> vector<8x32xf32>
    %c2 = arith.constant 2 : index
    %c0_13 = arith.constant 0 : index
    %20 = vector.load %arg2[%c2, %c0_13] : memref<3x32xf32, #tpu.memory_space<vmem>>, vector<1x32xf32>
    %21 = vector.broadcast %20 : vector<1x32xf32> to vector<8x32xf32>
    %22 = arith.addf %19, %21 : vector<8x32xf32>
    %c0_14 = arith.constant 0 : index
    %c0_15 = arith.constant 0 : index
    %23 = vector.load %arg1[%c0_14, %c0_15] : memref<8x32xf32, #tpu.memory_space<vmem>>, vector<8x32xf32>
    %24 = arith.addf %22, %23 : vector<8x32xf32>
    %c0_16 = arith.constant 0 : index
    %c0_17 = arith.constant 0 : index
    %25 = vector.load %arg6[%c0_16, %c0_17] : memref<8x32xf32, #tpu.memory_space<vmem>>, vector<8x32xf32>
    tpu.vector_store %arg6[%c0_16, %c0_17], %24 {strides = array<i32>} : memref<8x32xf32, #tpu.memory_space<vmem>>, vector<8x32xf32>,
    return
  }
  func.func @transform_0(%arg0: i32) -> (i32, i32) {
    %c0_i32 = arith.constant 0 : i32
    %c0_i32_0 = arith.constant 0 : i32
    return %arg0, %c0_i32 : i32, i32
  }
  func.func @transform_1(%arg0: i32) -> (i32, i32) {
    %c0_i32 = arith.constant 0 : i32
    %c0_i32_0 = arith.constant 0 : i32
    %c0_i32_1 = arith.constant 0 : i32
    return %c0_i32, %c0_i32_0 : i32, i32
  }
  func.func @transform_2(%arg0: i32) -> (i32, i32) {
    %c0_i32 = arith.constant 0 : i32
    %c0_i32_0 = arith.constant 0 : i32
    %c0_i32_1 = arith.constant 0 : i32
    return %c0_i32, %c0_i32_0 : i32, i32
  }
  func.func @transform_3(%arg0: i32) -> (i32, i32) {
    %c0_i32 = arith.constant 0 : i32
    %c0_i32_0 = arith.constant 0 : i32
    %c0_i32_1 = arith.constant 0 : i32
    return %c0_i32, %c0_i32_0 : i32, i32
  }
  func.func @transform_4(%arg0: i32) -> (i32, i32) {
    %c0_i32 = arith.constant 0 : i32
    %c0_i32_0 = arith.constant 0 : i32
    %c0_i32_1 = arith.constant 0 : i32
    return %c0_i32, %c0_i32_0 : i32, i32
  }
  func.func @transform_5(%arg0: i32) -> (i32, i32) {
    %c0_i32 = arith.constant 0 : i32
    %c0_i32_0 = arith.constant 0 : i32
    return %arg0, %c0_i32 : i32, i32
  }
}

module attributes {stable_mosaic.version = 11 : i64} {
  func.func @skipblock_kernel(%arg0: i32, %arg1: memref<8x32xf32, #tpu.memory_space<vmem>>, %arg2: memref<3x32xf32, #tpu.memory_space<vmem>>, %arg3: memref<32x16xbf16, #tpu.memory_space<vmem>>, %arg4: memref<1x16xf32, #tpu.memory_space<vmem>>, %arg5: memref<16x32xbf16, #tpu.memory_space<vmem>>, %arg6: memref<8x32xf32, #tpu.memory_space<vmem>>) attributes {dimension_semantics = [#tpu.dimension_semantics<arbitrary>], iteration_bounds = array<i64: 1>, scalar_prefetch = 0 : i64, scratch_operands = 0 : i64, tpu.core_type = #tpu.core_type<tc>, window_params = [{transform_indices = @transform_0, window_bounds = array<i64: 8, 32>}, {pipeline_mode = #tpu.pipeline_mode<synchronous>, transform_indices = @transform_1, window_bounds = array<i64: 3, 32>}, {pipeline_mode = #tpu.pipeline_mode<synchronous>, transform_indices = @transform_2, window_bounds = array<i64: 32, 16>}, {pipeline_mode = #tpu.pipeline_mode<synchronous>, transform_indices = @transform_3, window_bounds = array<i64: 1, 16>}, {pipeline_mode = #tpu.pipeline_mode<synchronous>, transform_indices = @transform_4, window_bounds = array<i64: 16, 32>}, {transform_indices = @transform_5, window_bounds = array<i64: 8, 32>}]} {
    %c0 = arith.constant 0 : index
    %c0_0 = arith.constant 0 : index
    %0 = vector.load %arg2[%c0, %c0_0] : memref<3x32xf32, #tpu.memory_space<vmem>>, vector<1x32xf32>
    %c1 = arith.constant 1 : index
    %c0_1 = arith.constant 0 : index
    %1 = vector.load %arg2[%c1, %c0_1] : memref<3x32xf32, #tpu.memory_space<vmem>>, vector<1x32xf32>
    %c0_2 = arith.constant 0 : index
    %c0_3 = arith.constant 0 : index
    %2 = vector.load %arg1[%c0_2, %c0_3] : memref<8x32xf32, #tpu.memory_space<vmem>>, vector<8x32xf32>
    %3 = vector.broadcast %0 : vector<1x32xf32> to vector<8x32xf32>
    %4 = arith.mulf %2, %3 : vector<8x32xf32>
    %5 = vector.broadcast %1 : vector<1x32xf32> to vector<8x32xf32>
    %6 = arith.addf %4, %5 : vector<8x32xf32>
    %cst = arith.constant 0.000000e+00 : f32
    %7 = vector.broadcast %cst : f32 to vector<8x32xf32>
    %8 = arith.maximumf %6, %7 : vector<8x32xf32>
    %9 = arith.truncf %8 : vector<8x32xf32> to vector<8x32xbf16>
    %c0_4 = arith.constant 0 : index
    %c0_5 = arith.constant 0 : index
    %10 = vector.load %arg3[%c0_4, %c0_5] : memref<32x16xbf16, #tpu.memory_space<vmem>>, vector<32x16xbf16>
    %cst_6 = arith.constant dense<0.000000e+00> : vector<8x16xf32>
    %11 = tpu.matmul %9, %10, %cst_6 {dimension_numbers = #tpu.dot_dimension_numbers<[1], [0], [0], [1], [0, 0, 1, 1], [], []>} : vector<8x32xbf16>, vector<32x16xbf16>, vector<8x16xf32> -> vector<8x16xf32>
    %c0_7 = arith.constant 0 : index
    %c0_8 = arith.constant 0 : index
    %12 = vector.load %arg4[%c0_7, %c0_8] : memref<1x16xf32, #tpu.memory_space<vmem>>, vector<1x16xf32>
    %13 = vector.broadcast %12 : vector<1x16xf32> to vector<8x16xf32>
    %14 = arith.addf %11, %13 : vector<8x16xf32>
    %cst_9 = arith.constant 0.000000e+00 : f32
    %15 = vector.broadcast %cst_9 : f32 to vector<8x16xf32>
    %16 = arith.maximumf %14, %15 : vector<8x16xf32>
    %17 = arith.truncf %16 : vector<8x16xf32> to vector<8x16xbf16>
    %c0_10 = arith.constant 0 : index
    %c0_11 = arith.constant 0 : index
    %18 = vector.load %arg5[%c0_10, %c0_11] : memref<16x32xbf16, #tpu.memory_space<vmem>>, vector<16x32xbf16>
    %cst_12 = arith.constant dense<0.000000e+00> : vector<8x32xf32>
    %19 = tpu.matmul %17, %18, %cst_12 {dimension_numbers = #tpu.dot_dimension_numbers<[1], [0], [0], [1], [0, 0, 1, 1], [], []>} : vector<8x16xbf16>, vector<16x32xbf16>, vector<8x32xf32> -> vector<8x32xf32>
    %c2 = arith.constant 2 : index
    %c0_13 = arith.constant 0 : index
    %20 = vector.load %arg2[%c2, %c0_13] : memref<3x32xf32, #tpu.memory_space<vmem>>, vector<1x32xf32>
    %21 = vector.broadcast %20 : vector<1x32xf32> to vector<8x32xf32>
    %22 = arith.addf %19, %21 : vector<8x32xf32>
    %c0_14 = arith.constant 0 : index
    %c0_15 = arith.constant 0 : index
    %23 = vector.load %arg1[%c0_14, %c0_15] : memref<8x32xf32, #tpu.memory_space<vmem>>, vector<8x32xf32>
    %24 = arith.addf %22, %23 : vector<8x32xf32>
    %c0_16 = arith.constant 0 : index
    %c0_17 = arith.constant 0 : index
    %25 = vector.load %arg6[%c0_16, %c0_17] : memref<8x32xf32, #tpu.memory_space<vmem>>, vector<8x32xf32>
    tpu.vector_store %arg6[%c0_16, %c0_17], %24 {strides = array<i32>} : memref<8x32xf32, #tpu.memory_space<vmem>>, vector<8x32xf32>,
    return
  }
  func.func @transform_0(%arg0: i32) -> (i32, i32) {
    %c0_i32 = arith.constant 0 : i32
    %c0_i32_0 = arith.constant 0 : i32
    return %arg0, %c0_i32 : i32, i32
  }
  func.func @transform_1(%arg0: i32) -> (i32, i32) {
    %c0_i32 = arith.constant 0 : i32
    %c0_i32_0 = arith.constant 0 : i32
    %c0_i32_1 = arith.constant 0 : i32
    return %c0_i32, %c0_i32_0 : i32, i32
  }
  func.func @transform_2(%arg0: i32) -> (i32, i32) {
    %c0_i32 = arith.constant 0 : i32
    %c0_i32_0 = arith.constant 0 : i32
    %c0_i32_1 = arith.constant 0 : i32
    return %c0_i32, %c0_i32_0 : i32, i32
  }
  func.func @transform_3(%arg0: i32) -> (i32, i32) {
    %c0_i32 = arith.constant 0 : i32
    %c0_i32_0 = arith.constant 0 : i32
    %c0_i32_1 = arith.constant 0 : i32
    return %c0_i32, %c0_i32_0 : i32, i32
  }
  func.func @transform_4(%arg0: i32) -> (i32, i32) {
    %c0_i32 = arith.constant 0 : i32
    %c0_i32_0 = arith.constant 0 : i32
    %c0_i32_1 = arith.constant 0 : i32
    return %c0_i32, %c0_i32_0 : i32, i32
  }
  func.func @transform_5(%arg0: i32) -> (i32, i32) {
    %c0_i32 = arith.constant 0 : i32
    %c0_i32_0 = arith.constant 0 : i32
    return %arg0, %c0_i32 : i32, i32
  }
}

</mosaic_0001>

<llo_original>
// kernel: tpu_custom_call.1
$region0: #{tpu_custom_call.1}
  #allocation0 [shape = 'u32[]', space=smem, size = 0x4, offset = 0x4, fixed_abs, tag = 'smem constant byte address 0x4 - core index']
  #allocation1 [shape = 'u32[72,128]{1,0:T(1,128)}', space=vmem, size = 0x9000, scoped, tag = 'internal scratch']
  %s0 = inlined_call_operand.vmem [shape: f32[8,32], index: 0, kind: input, shape index: {}]
  %s1 = inlined_call_operand.vmem [shape: f32[3,32], index: 1, kind: input, shape index: {}]
  %s2 = inlined_call_operand.vmem [shape: bf16[32,16], index: 2, kind: input, shape index: {}]
  %s3 = inlined_call_operand.vmem [shape: f32[1,16], index: 3, kind: input, shape index: {}]
  %s4 = inlined_call_operand.vmem [shape: bf16[16,32], index: 4, kind: input, shape index: {}]
  %s5 = inlined_call_operand.hbm [shape: f32[8,32], index: 5, kind: output, shape index: {}]
  %s6 = sld [smem:[#allocation0]]
  $region30: #{tpu_custom_call.1} parent=0
    _
  %s8 = ssub.s32 1, %s6
  %s9 = scalar_select 0, %s8, %s6
  $region1: #{tpu_custom_call.1} parent=0
    #allocation2 [shape = 'u8[4096]{0}', space=vmem, size = 0x1000, scoped, tag = 'output window, operand 0, single buffered']
    #allocation3 [shape = 's32[1]{0}', space=sflag, size = 0x4, scoped, tag = 'scoped memory for tpu_custom_call.1']
    %10 = vsyncpa [#allocation3], 0
    // Predicated region
    $region2: #{tpu_custom_call.1} parent=1 // pred_check
      _
    $region3: #{tpu_custom_call.1} parent=1 // pred_check_branch
      %12 = sbr.rel (0) target = $region5
    $region4: #{tpu_custom_call.1} parent=1 // pred_region
      _
    $region5: #{tpu_custom_call.1} parent=1 // pred_fallthru
      _
    // Predicated region
    $region6: #{tpu_custom_call.1} parent=1 // pred_check
      _
    $region7: #{tpu_custom_call.1} parent=1 // pred_check_branch
      %14 = sbr.rel (0) target = $region9
    $region8: #{tpu_custom_call.1} parent=1 // pred_region
      _
    $region9: #{tpu_custom_call.1} parent=1 // pred_fallthru
      _
    // Predicated region
    $region10: #{tpu_custom_call.1} parent=1 // pred_check
      _
    $region11: #{tpu_custom_call.1} parent=1 // pred_check_branch
      %16 = sbr.rel (0) target = $region13
    $region12: #{tpu_custom_call.1} parent=1 // pred_region
      _
    $region13: #{tpu_custom_call.1} parent=1 // pred_fallthru
      _
    // Predicated region
    $region14: #{tpu_custom_call.1} parent=1 // pred_check
      _
    $region15: #{tpu_custom_call.1} parent=1 // pred_check_branch
      %18 = sbr.rel (0) target = $region17
    $region16: #{tpu_custom_call.1} parent=1 // pred_region
      _
    $region17: #{tpu_custom_call.1} parent=1 // pred_fallthru
      _
    // Predicated region
    $region18: #{tpu_custom_call.1} parent=1 // pred_check
      _
    $region19: #{tpu_custom_call.1} parent=1 // pred_check_branch
      %20 = sbr.rel (0) target = $region21
    $region20: #{tpu_custom_call.1} parent=1 // pred_region
      _
    $region21: #{tpu_custom_call.1} parent=1 // pred_fallthru
      _
    %v22 = vld [vmem:[%s1] sm:$0x1]
    %v23 = vld [vmem:[%s1 + $0x1] sm:$0x1]
    %v24 = vld [vmem:[%s0] sm:$0xff]
    %v25 = vperm.slane %v22, 0
    %v26 = vmul.f32 %v24, %v25
    %v27 = vperm.slane %v23, 0
    %v28 = vadd.f32 %v26, %v27
    %v29 = vmax.f32 %v28, 0.0
    %v30 = vpack.c.bf16 %v29, %v29
    %v31 = vld [vmem:[%s2] sm:$0xf]
    %v32 = vld [vmem:[%s2 + $0x4] sm:$0xf]
    %v33 = vld [vmem:[%s2 + $0x8] sm:$0xf]
    %v34 = vld [vmem:[%s2 + $0xc] sm:$0xf]
    %v35 = vld [vmem:[%s3] sm:$0x1]
    %v37 = vperm.slane %v35, 0
    %v43 = vunpack.c.l.b16 %v31
    %v44 = vunpack.c.l.b16 %v32
    %v45 = vunpack.c.l.b16 %v33
    %v46 = vunpack.c.l.b16 %v34
    %v47 = vpack.c.b16 %v44, %v43
    %v48 = vpack.c.b16 %v46, %v45
    %vm51 = vcmask 261120
    %v53 = vsel %vm51, %v30, 0
    %55 = vmatpush.bf16.msra.mxu0 0
    %56 = vmatpush.bf16.msra.mxu0 0
    %57 = vmatpush.bf16.msra.mxu0 0
    %58 = vmatpush.bf16.msra.mxu0 0
    %59 = vmatpush.bf16.msra.mxu0 0
    %60 = vmatpush.bf16.msra.mxu0 0
    %61 = vmatpush.bf16.msra.mxu0 %v48
    %62 = vmatpush.bf16.msra.mxu0 %v47
    %63 = vmatmul.bf16.gmra.mxu0 %v53
    %v64 = vpop.f32.mrf.mxu0
    %v65 = vadd.f32 %v37, %v64
    %v66 = vpop.f32.mrf.mxu0
    %67 = vdwg.mxu0
    %v68 = vmax.f32 %v65, 0.0
    %v69 = vpack.c.bf16 %v68, %v68
    %v70 = vld [vmem:[%s4] sm:$0xf]
    %v71 = vld [vmem:[%s4 + $0x4] sm:$0xf]
    %v72 = vld [vmem:[%s1 + $0x2] sm:$0x1]
    %v73 = vperm.slane %v72, 0
    %v76 = vunpack.c.l.b16 %v70
    %v77 = vunpack.c.l.b16 %v71
    %v78 = vpack.c.b16 %v77, %v76
    %vm80 = vcmask 130048
    %v82 = vsel %vm80, %v69, 0
    %84 = vmatpush.bf16.msra.mxu0 0
    %85 = vmatpush.bf16.msra.mxu0 0
    %86 = vmatpush.bf16.msra.mxu0 0
    %87 = vmatpush.bf16.msra.mxu0 0
    %88 = vmatpush.bf16.msra.mxu0 0
    %89 = vmatpush.bf16.msra.mxu0 0
    %90 = vmatpush.bf16.msra.mxu0 0
    %91 = vmatpush.bf16.msra.mxu0 %v78
    %92 = vmatmul.bf16.gmra.mxu0 %v82
    %v93 = vpop.f32.mrf.mxu0
    %v94 = vadd.f32 %v73, %v93
    %v95 = vpop.f32.mrf.mxu0
    %96 = vdwg.mxu0
    %v97 = vadd.f32 %v94, %v24
    %98 = vst.msk [vmem:[#allocation2] sm:$0xff] %vm51, %v97
    // Predicated region
    $region22: #{tpu_custom_call.1} parent=1 // pred_check
      _
    $region23: #{tpu_custom_call.1} parent=1 // pred_check_branch
      %100 = sbr.rel (0) target = $region25
    $region24: #{tpu_custom_call.1} parent=1 // pred_region
      %102 = vsyncadd [#allocation3], 0
      %s104 = sshll.u32 [#allocation2], 4
      %s105 = int_to_ptr.vmem [resolvable:$true] %s104
      %s106 = sshll.u32 %s5, 4
      %s107 = int_to_ptr.hbm [resolvable:$true] %s106
      %109 = dma.vmem_to_hbm [thread:$0]  %s105, 128, %s107, [#allocation3]
    $region25: #{tpu_custom_call.1} parent=1 // pred_fallthru
      _
    // Predicated region
    $region26: #{tpu_custom_call.1} parent=1 // pred_check
      _
    $region27: #{tpu_custom_call.1} parent=1 // pred_check_branch
      %111 = sbr.rel (0) target = $region29
    $region28: #{tpu_custom_call.1} parent=1 // pred_region
      %113 = dma.done [#allocation3], 128
    $region29: #{tpu_custom_call.1} parent=1 // pred_fallthru
      _
    %114 = vsyncpa [#allocation3], 1

// kernel: tpu_custom_call.1
$region0: #{tpu_custom_call.1}
  #allocation0 [shape = 'u32[]', space=smem, size = 0x4, offset = 0x4, fixed_abs, tag = 'smem constant byte address 0x4 - core index']
  #allocation1 [shape = 'u32[72,128]{1,0:T(1,128)}', space=vmem, size = 0x9000, scoped, tag = 'internal scratch']
  %s0 = inlined_call_operand.vmem [shape: f32[8,32], index: 0, kind: input, shape index: {}]
  %s1 = inlined_call_operand.vmem [shape: f32[3,32], index: 1, kind: input, shape index: {}]
  %s2 = inlined_call_operand.vmem [shape: bf16[32,16], index: 2, kind: input, shape index: {}]
  %s3 = inlined_call_operand.vmem [shape: f32[1,16], index: 3, kind: input, shape index: {}]
  %s4 = inlined_call_operand.vmem [shape: bf16[16,32], index: 4, kind: input, shape index: {}]
  %s5 = inlined_call_operand.hbm [shape: f32[8,32], index: 5, kind: output, shape index: {}]
  %s6 = sld [smem:[#allocation0]]
  $region30: #{tpu_custom_call.1} parent=0
    _
  %s8 = ssub.s32 1, %s6
  %s9 = scalar_select 0, %s8, %s6
  $region1: #{tpu_custom_call.1} parent=0
    #allocation2 [shape = 'u8[4096]{0}', space=vmem, size = 0x1000, scoped, tag = 'output window, operand 0, single buffered']
    #allocation3 [shape = 's32[1]{0}', space=sflag, size = 0x4, scoped, tag = 'scoped memory for tpu_custom_call.1']
    %10 = vsyncpa [#allocation3], 0
    // Predicated region
    $region2: #{tpu_custom_call.1} parent=1 // pred_check
      _
    $region3: #{tpu_custom_call.1} parent=1 // pred_check_branch
      %12 = sbr.rel (0) target = $region5
    $region4: #{tpu_custom_call.1} parent=1 // pred_region
      _
    $region5: #{tpu_custom_call.1} parent=1 // pred_fallthru
      _
    // Predicated region
    $region6: #{tpu_custom_call.1} parent=1 // pred_check
      _
    $region7: #{tpu_custom_call.1} parent=1 // pred_check_branch
      %14 = sbr.rel (0) target = $region9
    $region8: #{tpu_custom_call.1} parent=1 // pred_region
      _
    $region9: #{tpu_custom_call.1} parent=1 // pred_fallthru
      _
    // Predicated region
    $region10: #{tpu_custom_call.1} parent=1 // pred_check
      _
    $region11: #{tpu_custom_call.1} parent=1 // pred_check_branch
      %16 = sbr.rel (0) target = $region13
    $region12: #{tpu_custom_call.1} parent=1 // pred_region
      _
    $region13: #{tpu_custom_call.1} parent=1 // pred_fallthru
      _
    // Predicated region
    $region14: #{tpu_custom_call.1} parent=1 // pred_check
      _
    $region15: #{tpu_custom_call.1} parent=1 // pred_check_branch
      %18 = sbr.rel (0) target = $region17
    $region16: #{tpu_custom_call.1} parent=1 // pred_region
      _
    $region17: #{tpu_custom_call.1} parent=1 // pred_fallthru
      _
    // Predicated region
    $region18: #{tpu_custom_call.1} parent=1 // pred_check
      _
    $region19: #{tpu_custom_call.1} parent=1 // pred_check_branch
      %20 = sbr.rel (0) target = $region21
    $region20: #{tpu_custom_call.1} parent=1 // pred_region
      _
    $region21: #{tpu_custom_call.1} parent=1 // pred_fallthru
      _
    %v22 = vld [vmem:[%s1] sm:$0x1]
    %v23 = vld [vmem:[%s1 + $0x1] sm:$0x1]
    %v24 = vld [vmem:[%s0] sm:$0xff]
    %v25 = vperm.slane %v22, 0
    %v26 = vmul.f32 %v24, %v25
    %v27 = vperm.slane %v23, 0
    %v28 = vadd.f32 %v26, %v27
    %v29 = vmax.f32 %v28, 0.0
    %v30 = vpack.c.bf16 %v29, %v29
    %v31 = vld [vmem:[%s2] sm:$0xf]
    %v32 = vld [vmem:[%s2 + $0x4] sm:$0xf]
    %v33 = vld [vmem:[%s2 + $0x8] sm:$0xf]
    %v34 = vld [vmem:[%s2 + $0xc] sm:$0xf]
    %v35 = vld [vmem:[%s3] sm:$0x1]
    %v37 = vperm.slane %v35, 0
    %v43 = vunpack.c.l.b16 %v31
    %v44 = vunpack.c.l.b16 %v32
    %v45 = vunpack.c.l.b16 %v33
    %v46 = vunpack.c.l.b16 %v34
    %v47 = vpack.c.b16 %v44, %v43
    %v48 = vpack.c.b16 %v46, %v45
    %vm51 = vcmask 261120
    %v53 = vsel %vm51, %v30, 0
    %55 = vmatpush.bf16.msra.mxu0 0
    %56 = vmatpush.bf16.msra.mxu0 0
    %57 = vmatpush.bf16.msra.mxu0 0
    %58 = vmatpush.bf16.msra.mxu0 0
    %59 = vmatpush.bf16.msra.mxu0 0
    %60 = vmatpush.bf16.msra.mxu0 0
    %61 = vmatpush.bf16.msra.mxu0 %v48
    %62 = vmatpush.bf16.msra.mxu0 %v47
    %63 = vmatmul.bf16.gmra.mxu0 %v53
    %v64 = vpop.f32.mrf.mxu0
    %v65 = vadd.f32 %v37, %v64
    %v66 = vpop.f32.mrf.mxu0
    %67 = vdwg.mxu0
    %v68 = vmax.f32 %v65, 0.0
    %v69 = vpack.c.bf16 %v68, %v68
    %v70 = vld [vmem:[%s4] sm:$0xf]
    %v71 = vld [vmem:[%s4 + $0x4] sm:$0xf]
    %v72 = vld [vmem:[%s1 + $0x2] sm:$0x1]
    %v73 = vperm.slane %v72, 0
    %v76 = vunpack.c.l.b16 %v70
    %v77 = vunpack.c.l.b16 %v71
    %v78 = vpack.c.b16 %v77, %v76
    %vm80 = vcmask 130048
    %v82 = vsel %vm80, %v69, 0
    %84 = vmatpush.bf16.msra.mxu0 0
    %85 = vmatpush.bf16.msra.mxu0 0
    %86 = vmatpush.bf16.msra.mxu0 0
    %87 = vmatpush.bf16.msra.mxu0 0
    %88 = vmatpush.bf16.msra.mxu0 0
    %89 = vmatpush.bf16.msra.mxu0 0
    %90 = vmatpush.bf16.msra.mxu0 0
    %91 = vmatpush.bf16.msra.mxu0 %v78
    %92 = vmatmul.bf16.gmra.mxu0 %v82
    %v93 = vpop.f32.mrf.mxu0
    %v94 = vadd.f32 %v73, %v93
    %v95 = vpop.f32.mrf.mxu0
    %96 = vdwg.mxu0
    %v97 = vadd.f32 %v94, %v24
    %98 = vst.msk [vmem:[#allocation2] sm:$0xff] %vm51, %v97
    // Predicated region
    $region22: #{tpu_custom_call.1} parent=1 // pred_check
      _
    $region23: #{tpu_custom_call.1} parent=1 // pred_check_branch
      %100 = sbr.rel (0) target = $region25
    $region24: #{tpu_custom_call.1} parent=1 // pred_region
      %102 = vsyncadd [#allocation3], 0
      %s104 = sshll.u32 [#allocation2], 4
      %s105 = int_to_ptr.vmem [resolvable:$true] %s104
      %s106 = sshll.u32 %s5, 4
      %s107 = int_to_ptr.hbm [resolvable:$true] %s106
      %109 = dma.vmem_to_hbm [thread:$0]  %s105, 128, %s107, [#allocation3]
    $region25: #{tpu_custom_call.1} parent=1 // pred_fallthru
      _
    // Predicated region
    $region26: #{tpu_custom_call.1} parent=1 // pred_check
      _
    $region27: #{tpu_custom_call.1} parent=1 // pred_check_branch
      %111 = sbr.rel (0) target = $region29
    $region28: #{tpu_custom_call.1} parent=1 // pred_region
      %113 = dma.done [#allocation3], 128
    $region29: #{tpu_custom_call.1} parent=1 // pred_fallthru
      _
    %114 = vsyncpa [#allocation3], 1

// kernel: tpu_custom_call.1
$region0: #{tpu_custom_call.1}
  #allocation0 [shape = 'u32[]', space=smem, size = 0x4, offset = 0x4, fixed_abs, tag = 'smem constant byte address 0x4 - core index']
  #allocation1 [shape = 'u32[72,128]{1,0:T(1,128)}', space=vmem, size = 0x9000, scoped, tag = 'internal scratch']
  %s0 = inlined_call_operand.vmem [shape: f32[8,32], index: 0, kind: input, shape index: {}]
  %s1 = inlined_call_operand.vmem [shape: f32[3,32], index: 1, kind: input, shape index: {}]
  %s2 = inlined_call_operand.vmem [shape: bf16[32,16], index: 2, kind: input, shape index: {}]
  %s3 = inlined_call_operand.vmem [shape: f32[1,16], index: 3, kind: input, shape index: {}]
  %s4 = inlined_call_operand.vmem [shape: bf16[16,32], index: 4, kind: input, shape index: {}]
  %s5 = inlined_call_operand.hbm [shape: f32[8,32], index: 5, kind: output, shape index: {}]
  %s6 = sld [smem:[#allocation0]]
  $region30: #{tpu_custom_call.1} parent=0
    _
  %s8 = ssub.s32 1, %s6
  %s9 = scalar_select 0, %s8, %s6
  $region1: #{tpu_custom_call.1} parent=0
    #allocation2 [shape = 'u8[4096]{0}', space=vmem, size = 0x1000, scoped, tag = 'output window, operand 0, single buffered']
    #allocation3 [shape = 's32[1]{0}', space=sflag, size = 0x4, scoped, tag = 'scoped memory for tpu_custom_call.1']
    %10 = vsyncpa [#allocation3], 0
    // Predicated region
    $region2: #{tpu_custom_call.1} parent=1 // pred_check
      _
    $region3: #{tpu_custom_call.1} parent=1 // pred_check_branch
      %12 = sbr.rel (0) target = $region5
    $region4: #{tpu_custom_call.1} parent=1 // pred_region
      _
    $region5: #{tpu_custom_call.1} parent=1 // pred_fallthru
      _
    // Predicated region
    $region6: #{tpu_custom_call.1} parent=1 // pred_check
      _
    $region7: #{tpu_custom_call.1} parent=1 // pred_check_branch
      %14 = sbr.rel (0) target = $region9
    $region8: #{tpu_custom_call.1} parent=1 // pred_region
      _
    $region9: #{tpu_custom_call.1} parent=1 // pred_fallthru
      _
    // Predicated region
    $region10: #{tpu_custom_call.1} parent=1 // pred_check
      _
    $region11: #{tpu_custom_call.1} parent=1 // pred_check_branch
      %16 = sbr.rel (0) target = $region13
    $region12: #{tpu_custom_call.1} parent=1 // pred_region
      _
    $region13: #{tpu_custom_call.1} parent=1 // pred_fallthru
      _
    // Predicated region
    $region14: #{tpu_custom_call.1} parent=1 // pred_check
      _
    $region15: #{tpu_custom_call.1} parent=1 // pred_check_branch
      %18 = sbr.rel (0) target = $region17
    $region16: #{tpu_custom_call.1} parent=1 // pred_region
      _
    $region17: #{tpu_custom_call.1} parent=1 // pred_fallthru
      _
    // Predicated region
    $region18: #{tpu_custom_call.1} parent=1 // pred_check
      _
    $region19: #{tpu_custom_call.1} parent=1 // pred_check_branch
      %20 = sbr.rel (0) target = $region21
    $region20: #{tpu_custom_call.1} parent=1 // pred_region
      _
    $region21: #{tpu_custom_call.1} parent=1 // pred_fallthru
      _
    %v22 = vld [vmem:[%s1] sm:$0x1]
    %v23 = vld [vmem:[%s1 + $0x1] sm:$0x1]
    %v24 = vld [vmem:[%s0] sm:$0xff]
    %v25 = vperm.slane %v22, 0
    %v26 = vmul.f32 %v24, %v25
    %v27 = vperm.slane %v23, 0
    %v28 = vadd.f32 %v26, %v27
    %v29 = vmax.f32 %v28, 0.0
    %v30 = vpack.c.bf16 %v29, %v29
    %v31 = vld [vmem:[%s2] sm:$0xf]
    %v32 = vld [vmem:[%s2 + $0x4] sm:$0xf]
    %v33 = vld [vmem:[%s2 + $0x8] sm:$0xf]
    %v34 = vld [vmem:[%s2 + $0xc] sm:$0xf]
    %v35 = vld [vmem:[%s3] sm:$0x1]
    %v37 = vperm.slane %v35, 0
    %v43 = vunpack.c.l.b16 %v31
    %v44 = vunpack.c.l.b16 %v32
    %v45 = vunpack.c.l.b16 %v33
    %v46 = vunpack.c.l.b16 %v34
    %v47 = vpack.c.b16 %v44, %v43
    %v48 = vpack.c.b16 %v46, %v45
    %vm51 = vcmask 261120
    %v53 = vsel %vm51, %v30, 0
    %55 = vmatpush.bf16.msra.mxu0 0
    %56 = vmatpush.bf16.msra.mxu0 0
    %57 = vmatpush.bf16.msra.mxu0 0
    %58 = vmatpush.bf16.msra.mxu0 0
    %59 = vmatpush.bf16.msra.mxu0 0
    %60 = vmatpush.bf16.msra.mxu0 0
    %61 = vmatpush.bf16.msra.mxu0 %v48
    %62 = vmatpush.bf16.msra.mxu0 %v47
    %63 = vmatmul.bf16.gmra.mxu0 %v53
    %v64 = vpop.f32.mrf.mxu0
    %v65 = vadd.f32 %v37, %v64
    %v66 = vpop.f32.mrf.mxu0
    %67 = vdwg.mxu0
    %v68 = vmax.f32 %v65, 0.0
    %v69 = vpack.c.bf16 %v68, %v68
    %v70 = vld [vmem:[%s4] sm:$0xf]
    %v71 = vld [vmem:[%s4 + $0x4] sm:$0xf]
    %v72 = vld [vmem:[%s1 + $0x2] sm:$0x1]
    %v73 = vperm.slane %v72, 0
    %v76 = vunpack.c.l.b16 %v70
    %v77 = vunpack.c.l.b16 %v71
    %v78 = vpack.c.b16 %v77, %v76
    %vm80 = vcmask 130048
    %v82 = vsel %vm80, %v69, 0
    %84 = vmatpush.bf16.msra.mxu0 0
    %85 = vmatpush.bf16.msra.mxu0 0
    %86 = vmatpush.bf16.msra.mxu0 0
    %87 = vmatpush.bf16.msra.mxu0 0
    %88 = vmatpush.bf16.msra.mxu0 0
    %89 = vmatpush.bf16.msra.mxu0 0
    %90 = vmatpush.bf16.msra.mxu0 0
    %91 = vmatpush.bf16.msra.mxu0 %v78
    %92 = vmatmul.bf16.gmra.mxu0 %v82
    %v93 = vpop.f32.mrf.mxu0
    %v94 = vadd.f32 %v73, %v93
    %v95 = vpop.f32.mrf.mxu0
    %96 = vdwg.mxu0
    %v97 = vadd.f32 %v94, %v24
    %98 = vst.msk [vmem:[#allocation2] sm:$0xff] %vm51, %v97
    // Predicated region
    $region22: #{tpu_custom_call.1} parent=1 // pred_check
      _
    $region23: #{tpu_custom_call.1} parent=1 // pred_check_branch
      %100 = sbr.rel (0) target = $region25
    $region24: #{tpu_custom_call.1} parent=1 // pred_region
      %102 = vsyncadd [#allocation3], 0
      %s104 = sshll.u32 [#allocation2], 4
      %s105 = int_to_ptr.vmem [resolvable:$true] %s104
      %s106 = sshll.u32 %s5, 4
      %s107 = int_to_ptr.hbm [resolvable:$true] %s106
      %109 = dma.vmem_to_hbm [thread:$0]  %s105, 128, %s107, [#allocation3]
    $region25: #{tpu_custom_call.1} parent=1 // pred_fallthru
      _
    // Predicated region
    $region26: #{tpu_custom_call.1} parent=1 // pred_check
      _
    $region27: #{tpu_custom_call.1} parent=1 // pred_check_branch
      %111 = sbr.rel (0) target = $region29
    $region28: #{tpu_custom_call.1} parent=1 // pred_region
      %113 = dma.done [#allocation3], 128
    $region29: #{tpu_custom_call.1} parent=1 // pred_fallthru
      _
    %114 = vsyncpa [#allocation3], 1

</llo_original>
